<compile_context>
chip_gen: v6e
topology: v6e:2x2x1
jax: 0.10.0
libtpu: 0.0.40
codegen_flags: <defaults>
</compile_context>

<pallas_src>
import functools

import jax
import jax.numpy as jnp
from jax import lax
from jax.experimental import pallas as pl
from jax.experimental.pallas import tpu as pltpu


_LANE = 128
_SUBLANE_ALIGN = 32       # covers f32 (8), bf16 (16) and int8/bool (32) sublane packing


# ---------------------------------------------------------------------------
# Helpers
# ---------------------------------------------------------------------------
def _focal_pow(x, gamma):
    """x ** gamma, avoiding float-exponent pow (exp+log on EUP) when possible."""
    if gamma == 2.0:
        return x * x
    if gamma == 1.0:
        return x
    if float(gamma).is_integer() and gamma >= 0:
        return lax.integer_pow(x, int(gamma))
    return jnp.power(x, gamma)


def _round_up(x, m):
    return ((x + m - 1) // m) * m


def _padded_row_bytes(cols, itemsize):
    """Bytes one row of a (rows, cols) VMEM tile occupies (minor dim lane-padded)."""
    return _round_up(max(int(cols), 1), _LANE) * int(itemsize)


def _choose_tile_rows(rows, stream_row_bytes, scratch_row_bytes, budget_bytes):
    """Largest sublane-aligned tile whose double-buffered tiles + scratch fit budget."""
    per_row = 2 * stream_row_bytes + scratch_row_bytes   # 2x: BlockSpec double buffering
    tb = max(_SUBLANE_ALIGN, budget_bytes // max(1, per_row))
    tb = (tb // _SUBLANE_ALIGN) * _SUBLANE_ALIGN
    if tb >= rows:
        return rows                                      # single full-extent block
    return tb


# ---------------------------------------------------------------------------
# Kernels
# ---------------------------------------------------------------------------
def _focal_softmax_kernel(logits_ref, target_ref, out_ref, acc_ref, *,
                          alpha, gamma, epsilon, valid_rows, tile_rows):
    # logits_ref: (TB, C) VMEM (native dtype); target_ref: (TB, 1) int32 VMEM
    # out_ref: (1, 8, 128) f32 VMEM (per-split partial sum); acc_ref: (TB, 1) f32 VMEM
    s = pl.program_id(1)
    n_s = pl.num_programs(1)

    @pl.when(s == 0)
    def _init():
        acc_ref[...] = jnp.zeros_like(acc_ref)

    logits = logits_ref[...].astype(jnp.float32)            # cast in-kernel (bf16 ok)
    tgt = target_ref[...]                                    # (TB, 1) int32
    tb, c = logits.shape

    # Numerically stable softmax; only the per-row target probability is needed.
    col = lax.broadcasted_iota(jnp.int32, (tb, c), 1)
    m = jnp.max(logits, axis=-1, keepdims=True)
    e = jnp.exp(logits - m)                                  # only full-tile transcendental
    denom = jnp.sum(e, axis=-1, keepdims=True)               # (TB, 1)
    # Fused one-hot: select the target column of e directly (no f32 one-hot tile).
    e_t = jnp.sum(jnp.where(col == tgt, e, 0.0), axis=-1, keepdims=True)
    p_t = e_t / denom                                        # (TB, 1)

    row_loss = -alpha * _focal_pow(1.0 - p_t, gamma) * jnp.log(p_t + epsilon)

    # Mask rows past the true batch (ragged last tile) at (TB, 1) granularity.
    gi = pl.program_id(0) * n_s + s                          # global block index
    row = gi * tile_rows + lax.broadcasted_iota(jnp.int32, (tb, 1), 0)
    acc_ref[...] += jnp.where(row < valid_rows, row_loss, 0.0)

    @pl.when(s == n_s - 1)
    def _finalize():
        out_ref[...] = jnp.full(out_ref.shape, jnp.sum(acc_ref[...]), jnp.float32)


def _focal_sigmoid_kernel(logits_ref, target_ref, out_ref, acc_ref, *,
                          alpha, gamma, epsilon, valid_rows, tile_rows):
    # logits_ref / target_ref: (TB, C') VMEM (native dtype, possibly lane-dense folded)
    s = pl.program_id(1)
    n_s = pl.num_programs(1)

    @pl.when(s == 0)
    def _init():
        acc_ref[...] = jnp.zeros_like(acc_ref)

    x = logits_ref[...].astype(jnp.float32)
    y = target_ref[...].astype(jnp.float32)
    tb, c = x.shape

    p = jax.nn.sigmoid(x)
    # Keep the epsilon-clamped torch formulation for an exact semantic match.
    pos = -alpha * y * _focal_pow(1.0 - p, gamma) * jnp.log(p + epsilon)
    neg = -(1.0 - alpha) * (1.0 - y) * _focal_pow(p, gamma) * jnp.log(1.0 - p + epsilon)
    loss_rows = jnp.sum(pos + neg, axis=1, keepdims=True)    # (TB, 1) lane reduce

    gi = pl.program_id(0) * n_s + s
    row = gi * tile_rows + lax.broadcasted_iota(jnp.int32, (tb, 1), 0)
    acc_ref[...] += jnp.where(row < valid_rows, loss_rows, 0.0)

    @pl.when(s == n_s - 1)
    def _finalize():
        out_ref[...] = jnp.full(out_ref.shape, jnp.sum(acc_ref[...]), jnp.float32)


# ---------------------------------------------------------------------------
# Wrapper matching the PyTorch module semantics
# ---------------------------------------------------------------------------
class FocalLoss:
    def __init__(self, num_labels, activation_type="softmax",
                 gamma=2.0, alpha=0.25, epsilon=1e-9,
                 tile_rows=None, vmem_budget_bytes=24 << 20, num_core_splits=2):
        self.num_labels = num_labels
        self.gamma = float(gamma)
        self.alpha = float(alpha)
        self.epsilon = float(epsilon)
        self.activation_type = activation_type
        self.tile_rows = tile_rows                  # manual override (testing / tuning)
        self.vmem_budget_bytes = int(vmem_budget_bytes)
        self.num_core_splits = int(num_core_splits)  # 2 feeds both v7x TensorCores

    def __call__(self, logits, target):
        B = logits.shape[0]
        C = self.num_labels

        if self.activation_type == "softmax":
            x = logits                                              # native dtype, no upcast
            tgt = jnp.reshape(target, (-1, 1)).astype(jnp.int32)    # (B, 1) class indices
            rows, cols, tgt_cols = B, C, 1
            divisor = B                                             # loss.sum(1).mean()
            kernel_fn = _focal_softmax_kernel
            trans = rows * cols + 2 * rows
        elif self.activation_type == "sigmoid":
            x = logits
            y = target
            if y.dtype == jnp.bool_:
                y = y.astype(jnp.int8)                              # 1-byte, Pallas-friendly
            rows, cols = B, C
            n = B * C
            # Lane-dense fold: purely elementwise loss, so a free row-major reshape
            # lets every vreg lane carry useful work when C is not a 128 multiple.
            if n % _LANE == 0 and C % _LANE != 0:
                rows, cols = n // _LANE, _LANE
                x = jnp.reshape(x, (rows, cols))
                y = jnp.reshape(y, (rows, cols))
            tgt = y
            tgt_cols = cols
            divisor = B * C                                         # loss.mean()
            kernel_fn = _focal_sigmoid_kernel
            trans = 3 * rows * cols
        else:
            raise ValueError(f"unknown activation_type: {self.activation_type}")

        # --- tile sizing: purely byte-budgeted, lane-padding & double-buffer aware ---
        stream_row_bytes = (_padded_row_bytes(cols, x.dtype.itemsize)
                            + _padded_row_bytes(tgt_cols, tgt.dtype.itemsize))
        scratch_row_bytes = _padded_row_bytes(1, 4)                 # (TB, 1) f32 accumulator
        tb = self.tile_rows if self.tile_rows is not None else _choose_tile_rows(
            rows, stream_row_bytes, scratch_row_bytes, self.vmem_budget_bytes)

        n_blocks = pl.cdiv(rows, tb)
        # Split blocks across TensorCores only when it divides evenly, so no block
        # ever starts fully out of bounds (ragged last block is still masked).
        if self.num_core_splits > 1 and n_blocks >= self.num_core_splits \
                and n_blocks % self.num_core_splits == 0:
            n_splits = self.num_core_splits
        else:
            n_splits = 1
        steps = n_blocks // n_splits

        kernel = functools.partial(
            kernel_fn, alpha=self.alpha, gamma=self.gamma, epsilon=self.epsilon,
            valid_rows=rows, tile_rows=tb)

        cost = pl.CostEstimate(
            flops=12 * rows * cols,
            transcendentals=int(trans),
            bytes_accessed=int(x.size * x.dtype.itemsize
                               + tgt.size * tgt.dtype.itemsize
                               + n_splits * 8 * _LANE * 4))

        in_specs = [
            pl.BlockSpec((tb, cols), lambda c, s: (c * steps + s, 0)),
            pl.BlockSpec((tb, tgt_cols), lambda c, s: (c * steps + s, 0)),
        ]
        out_spec = pl.BlockSpec((1, 8, _LANE), lambda c, s: (c, 0, 0))

        partials = pl.pallas_call(
            kernel,
            out_shape=jax.ShapeDtypeStruct((n_splits, 8, _LANE), jnp.float32),
            grid=(n_splits, steps),
            in_specs=in_specs,
            out_specs=out_spec,
            scratch_shapes=[pltpu.VMEM((tb, 1), jnp.float32)],      # per-core row accumulator
            compiler_params=pltpu.CompilerParams(
                dimension_semantics=("parallel", "arbitrary"),
                vmem_limit_bytes=int(self.vmem_budget_bytes + (8 << 20))),
            cost_estimate=cost,
        )(x, tgt)

        # Combine the per-split partial sums and normalize outside the kernel.
        return jnp.sum(partials[:, 0, 0]) / jnp.float32(divisor)


# ---------------------------------------------------------------------------
# Pure-JAX reference (mirrors the PyTorch forward exactly)
# ---------------------------------------------------------------------------
def _ref_focal(logits, target, num_labels, activation_type, gamma, alpha, epsilon):
    logits = logits.astype(jnp.float32)
    if activation_type == "softmax":
        one_hot = jax.nn.one_hot(target, num_labels, dtype=jnp.float32)
        probs = jax.nn.softmax(logits, axis=-1)
        loss = -alpha * one_hot * jnp.power(1.0 - probs, gamma) * jnp.log(probs + epsilon)
        return jnp.mean(jnp.sum(loss, axis=1))
    else:
        multi_hot = target.astype(jnp.float32)
        probs = jax.nn.sigmoid(logits)
        loss = -alpha * multi_hot * jnp.power(1.0 - probs, gamma) * jnp.log(probs + epsilon)
        loss = loss + (-(1.0 - alpha)) * (1.0 - multi_hot) * jnp.power(probs, gamma) \
            * jnp.log(1.0 - probs + epsilon)
        return jnp.mean(loss)


if __name__ == "__main__":
    key = jax.random.PRNGKey(0)
    ks = jax.random.split(key, 10)
    C = 32

    # 1) softmax, f32 logits, single tile
    B = 8
    logits = jax.random.normal(ks[0], (B, C), dtype=jnp.float32)
    labels = jax.random.randint(ks[1], (B,), 0, C, dtype=jnp.int32)
    out = jax.block_until_ready(FocalLoss(C, "softmax")(logits, labels))
    ref = _ref_focal(logits, labels, C, "softmax", 2.0, 0.25, 1e-9)
    assert jnp.allclose(out, ref, rtol=1e-5, atol=1e-6), (out, ref)

    # 2) sigmoid, f32 logits + int8 multi-hot (native narrow target dtype),
    #    exercises the lane-dense fold (8x32 -> 2x128)
    logits2 = jax.random.normal(ks[2], (B, C), dtype=jnp.float32)
    multi_hot = (jax.random.uniform(ks[3], (B, C)) > 0.7).astype(jnp.int8)
    out2 = jax.block_until_ready(FocalLoss(C, "sigmoid")(logits2, multi_hot))
    ref2 = _ref_focal(logits2, multi_hot, C, "sigmoid", 2.0, 0.25, 1e-9)
    assert jnp.allclose(out2, ref2, rtol=1e-5, atol=1e-6), (out2, ref2)

    # 3) softmax, multi-tile grid + two-split "parallel" axis + ragged last tile
    B3 = 120
    logits3 = jax.random.normal(ks[4], (B3, C), dtype=jnp.float32)
    labels3 = jax.random.randint(ks[5], (B3,), 0, C, dtype=jnp.int32)
    out3 = jax.block_until_ready(FocalLoss(C, "softmax", tile_rows=32)(logits3, labels3))
    ref3 = _ref_focal(logits3, labels3, C, "softmax", 2.0, 0.25, 1e-9)
    assert jnp.allclose(out3, ref3, rtol=1e-5, atol=1e-6), (out3, ref3)

    # 4) softmax, bf16 logits streamed natively (cast to f32 inside the kernel)
    logits4 = jax.random.normal(ks[6], (B, C), dtype=jnp.float32).astype(jnp.bfloat16)
    labels4 = jax.random.randint(ks[7], (B,), 0, C, dtype=jnp.int32)
    out4 = jax.block_until_ready(FocalLoss(C, "softmax")(logits4, labels4))
    ref4 = _ref_focal(logits4.astype(jnp.float32), labels4, C, "softmax", 2.0, 0.25, 1e-9)
    assert jnp.allclose(out4, ref4, rtol=1e-4, atol=1e-5), (out4, ref4)

    # 5) sigmoid, multi-tile + two splits on the folded lane-dense layout
    B5 = 64
    logits5 = jax.random.normal(ks[8], (B5, C), dtype=jnp.float32)
    multi_hot5 = (jax.random.uniform(ks[9], (B5, C)) > 0.7).astype(jnp.float32)
    out5 = jax.block_until_ready(FocalLoss(C, "sigmoid", tile_rows=8)(logits5, multi_hot5))
    ref5 = _ref_focal(logits5, multi_hot5, C, "sigmoid", 2.0, 0.25, 1e-9)
    assert jnp.allclose(out5, ref5, rtol=1e-5, atol=1e-6), (out5, ref5)

    print("KERNEL_OK")
</pallas_src>

<mosaic_0001>
module attributes {stable_mosaic.version = 11 : i64} {
  func.func @_focal_softmax_kernel(%arg0: i32, %arg1: i32, %arg2: memref<8x32xf32, #tpu.memory_space<vmem>>, %arg3: memref<8x1xi32, #tpu.memory_space<vmem>>, %arg4: memref<1x8x128xf32, #tpu.memory_space<vmem>>, %arg5: memref<8x1xf32, #tpu.memory_space<vmem>>) attributes {dimension_semantics = [#tpu.dimension_semantics<parallel>, #tpu.dimension_semantics<arbitrary>], iteration_bounds = array<i64: 1, 1>, scalar_prefetch = 0 : i64, scratch_operands = 1 : i64, tpu.core_type = #tpu.core_type<tc>, window_params = [{transform_indices = @transform_0, window_bounds = array<i64: 8, 32>}, {transform_indices = @transform_1, window_bounds = array<i64: 8, 1>}, {transform_indices = @transform_2, window_bounds = array<i64: 1, 8, 128>}]} {
    %c0_i32 = arith.constant 0 : i32
    %0 = arith.cmpi eq, %arg1, %c0_i32 : i32
    %1 = arith.extui %0 : i1 to i32
    %c0_i32_0 = arith.constant 0 : i32
    %2 = arith.cmpi ne, %1, %c0_i32_0 : i32
    scf.if %2 {
      %cst_18 = arith.constant 0.000000e+00 : f32
      %45 = vector.broadcast %cst_18 : f32 to vector<8x1xf32>
      %c0_19 = arith.constant 0 : index
      %c0_20 = arith.constant 0 : index
      %46 = vector.load %arg5[%c0_19, %c0_20] : memref<8x1xf32, #tpu.memory_space<vmem>>, vector<8x1xf32>
      tpu.vector_store %arg5[%c0_19, %c0_20], %45 {strides = array<i32>} : memref<8x1xf32, #tpu.memory_space<vmem>>, vector<8x1xf32>,
    } else {
    }
    %c0 = arith.constant 0 : index
    %c0_1 = arith.constant 0 : index
    %3 = vector.load %arg2[%c0, %c0_1] : memref<8x32xf32, #tpu.memory_space<vmem>>, vector<8x32xf32>
    %c0_2 = arith.constant 0 : index
    %c0_3 = arith.constant 0 : index
    %4 = vector.load %arg3[%c0_2, %c0_3] : memref<8x1xi32, #tpu.memory_space<vmem>>, vector<8x1xi32>
    %5 = tpu.iota {dimensions = array<i32: 1>} : vector<8x32xi32>
    %cst = arith.constant dense<0xFF800000> : vector<8xf32>
    %6 = vector.multi_reduction <maximumf>, %3, %cst [1] : vector<8x32xf32> to vector<8xf32>
    %7 = vector.shape_cast %6 : vector<8xf32> to vector<8x1xf32>
    %8 = vector.broadcast %7 : vector<8x1xf32> to vector<8x32xf32>
    %9 = arith.subf %3, %8 : vector<8x32xf32>
    %10 = math.exp %9 : vector<8x32xf32>
    %cst_4 = arith.constant dense<0.000000e+00> : vector<8xf32>
    %11 = vector.multi_reduction <add>, %10, %cst_4 [1] : vector<8x32xf32> to vector<8xf32>
    %12 = vector.shape_cast %11 : vector<8xf32> to vector<8x1xf32>
    %13 = vector.broadcast %4 : vector<8x1xi32> to vector<8x32xi32>
    %14 = arith.cmpi eq, %5, %13 : vector<8x32xi32>
    %cst_5 = arith.constant 0.000000e+00 : f32
    %15 = vector.broadcast %cst_5 : f32 to vector<8x32xf32>
    %16 = arith.select %14, %10, %15 : vector<8x32xi1>, vector<8x32xf32>
    %cst_6 = arith.constant dense<0.000000e+00> : vector<8xf32>
    %17 = vector.multi_reduction <add>, %16, %cst_6 [1] : vector<8x32xf32> to vector<8xf32>
    %18 = vector.shape_cast %17 : vector<8xf32> to vector<8x1xf32>
    %19 = arith.divf %18, %12 : vector<8x1xf32>
    %cst_7 = arith.constant 1.000000e+00 : f32
    %20 = vector.broadcast %cst_7 : f32 to vector<8x1xf32>
    %21 = arith.subf %20, %19 : vector<8x1xf32>
    %22 = arith.mulf %21, %21 : vector<8x1xf32>
    %cst_8 = arith.constant -2.500000e-01 : f32
    %23 = vector.broadcast %cst_8 : f32 to vector<8x1xf32>
    %24 = arith.mulf %23, %22 : vector<8x1xf32>
    %cst_9 = arith.constant 9.99999971E-10 : f32
    %25 = vector.broadcast %cst_9 : f32 to vector<8x1xf32>
    %26 = arith.addf %19, %25 : vector<8x1xf32>
    %27 = math.log %26 : vector<8x1xf32>
    %28 = arith.mulf %24, %27 : vector<8x1xf32>
    %c1_i32 = arith.constant 1 : i32
    %29 = arith.muli %arg0, %c1_i32 : i32
    %30 = arith.addi %29, %arg1 : i32
    %c8_i32 = arith.constant 8 : i32
    %31 = arith.muli %30, %c8_i32 : i32
    %32 = tpu.iota {dimensions = array<i32: 0>} : vector<8x1xi32>
    %33 = vector.broadcast %31 : i32 to vector<8x1xi32>
    %34 = arith.addi %33, %32 : vector<8x1xi32>
    %c0_10 = arith.constant 0 : index
    %c0_11 = arith.constant 0 : index
    %35 = vector.load %arg5[%c0_10, %c0_11] : memref<8x1xf32, #tpu.memory_space<vmem>>, vector<8x1xf32>
    %c8_i32_12 = arith.constant 8 : i32
    %36 = vector.broadcast %c8_i32_12 : i32 to vector<8x1xi32>
    %37 = arith.cmpi slt, %34, %36 : vector<8x1xi32>
    %cst_13 = arith.constant 0.000000e+00 : f32
    %38 = vector.broadcast %cst_13 : f32 to vector<8x1xf32>
    %39 = arith.select %37, %28, %38 : vector<8x1xi1>, vector<8x1xf32>
    %40 = arith.addf %35, %39 : vector<8x1xf32>
    %c0_14 = arith.constant 0 : index
    %c0_15 = arith.constant 0 : index
    %41 = vector.load %arg5[%c0_14, %c0_15] : memref<8x1xf32, #tpu.memory_space<vmem>>, vector<8x1xf32>
    tpu.vector_store %arg5[%c0_14, %c0_15], %40 {strides = array<i32>} : memref<8x1xf32, #tpu.memory_space<vmem>>, vector<8x1xf32>,
    %c0_i32_16 = arith.constant 0 : i32
    %42 = arith.cmpi eq, %arg1, %c0_i32_16 : i32
    %43 = arith.extui %42 : i1 to i32
    %c0_i32_17 = arith.constant 0 : i32
    %44 = arith.cmpi ne, %43, %c0_i32_17 : i32
    scf.if %44 {
      %c0_18 = arith.constant 0 : index
      %c0_19 = arith.constant 0 : index
      %45 = vector.load %arg5[%c0_18, %c0_19] : memref<8x1xf32, #tpu.memory_space<vmem>>, vector<8x1xf32>
      %46 = vector.shape_cast %45 : vector<8x1xf32> to vector<1x8x1xf32>
      %cst_20 = arith.constant dense<0.000000e+00> : vector<1xf32>
      %47 = vector.multi_reduction <add>, %46, %cst_20 [1, 2] : vector<1x8x1xf32> to vector<1xf32>
      %48 = vector.shape_cast %47 : vector<1xf32> to vector<1x1x1xf32>
      %49 = vector.extract %48[0, 0, 0] : f32 from vector<1x1x1xf32>
      %50 = vector.broadcast %49 : f32 to vector<1x8x128xf32>
      %c0_21 = arith.constant 0 : index
      %c0_22 = arith.constant 0 : index
      %c0_23 = arith.constant 0 : index
      %51 = vector.load %arg4[%c0_21, %c0_22, %c0_23] : memref<1x8x128xf32, #tpu.memory_space<vmem>>, vector<1x8x128xf32>
      tpu.vector_store %arg4[%c0_21, %c0_22, %c0_23], %50 {strides = array<i32>} : memref<1x8x128xf32, #tpu.memory_space<vmem>>, vector<1x8x128xf32>,
    } else {
    }
    return
  }
  func.func @transform_0(%arg0: i32, %arg1: i32) -> (i32, i32) {
    %c1_i32 = arith.constant 1 : i32
    %0 = arith.muli %arg0, %c1_i32 : i32
    %1 = arith.addi %0, %arg1 : i32
    %c0_i32 = arith.constant 0 : i32
    %c0_i32_0 = arith.constant 0 : i32
    return %1, %c0_i32 : i32, i32
  }
  func.func @transform_1(%arg0: i32, %arg1: i32) -> (i32, i32) {
    %c1_i32 = arith.constant 1 : i32
    %0 = arith.muli %arg0, %c1_i32 : i32
    %1 = arith.addi %0, %arg1 : i32
    %c0_i32 = arith.constant 0 : i32
    %c0_i32_0 = arith.constant 0 : i32
    return %1, %c0_i32 : i32, i32
  }
  func.func @transform_2(%arg0: i32, %arg1: i32) -> (i32, i32, i32) {
    %c0_i32 = arith.constant 0 : i32
    %c0_i32_0 = arith.constant 0 : i32
    %c0_i32_1 = arith.constant 0 : i32
    return %arg0, %c0_i32, %c0_i32_0 : i32, i32, i32
  }
}

</mosaic_0001>

<llo_original>
// kernel: tpu_custom_call.1
$region0: #{tpu_custom_call.1}
  #allocation0 [shape = 'u32[]', space=smem, size = 0x4, offset = 0x4, fixed_abs, tag = 'smem constant byte address 0x4 - core index']
  #allocation1 [shape = 'u32[144,128]{1,0:T(1,128)}', space=vmem, size = 0x12000, scoped, tag = 'internal scratch']
  #allocation2 [shape = 'f32[8,1]{1,0:T(8,128)}', space=vmem, size = 0x1000, scoped, tag = 'scratch operand']
  %s0 = inlined_call_operand.vmem [shape: f32[8,32], index: 0, kind: input, shape index: {}]
  %s1 = inlined_call_operand.vmem [shape: s32[8,1], index: 1, kind: input, shape index: {}]
  %s2 = inlined_call_operand.hbm [shape: f32[1,8,128], index: 2, kind: output, shape index: {}]
  %s3 = sld [smem:[#allocation0]]
  $region26: #{tpu_custom_call.1} parent=0
    _
  %s5 = ssub.s32 1, %s3
  %s6 = scalar_select 0, %s5, %s3
  $region1: #{tpu_custom_call.1} parent=0
    #allocation3 [shape = 'u8[4096]{0}', space=vmem, size = 0x1000, scoped, tag = 'output window, operand 0, single buffered']
    #allocation4 [shape = 's32[1]{0}', space=sflag, size = 0x4, scoped, tag = 'scoped memory for tpu_custom_call.1']
    %7 = vsyncpa [#allocation4], 0
    // Predicated region
    $region2: #{tpu_custom_call.1} parent=1 // pred_check
      _
    $region3: #{tpu_custom_call.1} parent=1 // pred_check_branch
      %9 = sbr.rel (0) target = $region5
    $region4: #{tpu_custom_call.1} parent=1 // pred_region
      %s10 = sadd.s32 0, 0
      %p11 = scmp.lt.s32.totalorder %s10, 0
      %s12 = scalar_select %p11, %s10, 0
      %s13 = smul.addr %s12, 8
      %s14 = scalar_lea.vmem %s0, %s13
      %s15 = sadd.s32 0, 0
    $region5: #{tpu_custom_call.1} parent=1 // pred_fallthru
      _
    // Predicated region
    $region6: #{tpu_custom_call.1} parent=1 // pred_check
      _
    $region7: #{tpu_custom_call.1} parent=1 // pred_check_branch
      %17 = sbr.rel (0) target = $region9
    $region8: #{tpu_custom_call.1} parent=1 // pred_region
      %s18 = sadd.s32 0, 0
      %p19 = scmp.lt.s32.totalorder %s18, 0
      %s20 = scalar_select %p19, %s18, 0
      %s21 = smul.addr %s20, 8
      %s22 = scalar_lea.vmem %s1, %s21
      %s23 = sadd.s32 0, 0
    $region9: #{tpu_custom_call.1} parent=1 // pred_fallthru
      _
    %s24 = sadd.s32 0, 0
    %p25 = scmp.lt.s32.totalorder %s24, 0
    %s26 = scalar_select %p25, %s24, 0
    %s27 = smul.addr %s26, 8
    %s28 = scalar_lea.vmem %s0, %s27
    %s29 = sadd.s32 0, 0
    %p30 = scmp.lt.s32.totalorder %s29, 0
    %s31 = scalar_select %p30, %s29, 0
    %s32 = smul.addr %s31, 8
    %s33 = scalar_lea.vmem %s1, %s32
    %s34 = sadd.s32 0, 0
    %p35 = scmp.lt.s32.totalorder %s34, 0
    %s36 = scalar_select %p35, %s34, 0
    %s37 = smul.addr %s36, 8
    %s38 = scalar_lea.vmem %s0, %s37
    %s39 = sadd.s32 0, 0
    %s40 = sadd.s32 0, 0
    %p41 = scmp.lt.s32.totalorder %s40, 0
    %s42 = scalar_select %p41, %s40, 0
    %s43 = smul.addr %s42, 8
    %s44 = scalar_lea.vmem %s1, %s43
    %s45 = sadd.s32 0, 0
    %p46 = scmp.eq.s32.totalorder 0, 0
    // Predicated region
    $region10: #{tpu_custom_call.1} parent=1 // pred_check
      %p47 = pneg %p46
    $region11: #{tpu_custom_call.1} parent=1 // pred_check_branch
      %49 = sbr.rel (%p47) target = $region13
    $region12: #{tpu_custom_call.1} parent=1 // pred_region
      %vm50 = vcmask 7168
      %51 = vst.msk [vmem:[#allocation2] sm:$0xff] %vm50, 0.0
    $region13: #{tpu_custom_call.1} parent=1 // pred_fallthru
      _
    %v52 = vld [vmem:[%s38] sm:$0xff]
    %v53 = vld [vmem:[%s44] sm:$0xff]
    %v54 = vlaneseq
    %v55 = vand.u32 %v54, 127
    %vm56 = vcmask 261120
    %v57 = vsel %vm56, %v52, -inf
    %58 = vmax.xlane.f32.xlu0 %v57
    %v59 = vpop.xlane.xlu0 %58
    %v60 = vsub.f32 %v52, %v59
    %v61 = vmul.f32 %v60, 1.442695
    %v62 = vpow.pop %v61
    %v63 = vsel %vm56, %v62, 0.0
    %64 = vadd.xlane.f32.xlu0 %v63
    %v65 = vpop.xlane.xlu0 %64
    %66 = vset.pattern.permute.xlu0 0
    %67 = vperm.xlu0 %66, %v53
    %v68 = vpop.permute.xlu0 %67
    %vm69 = vcmp.eq.s32.totalorder %v55, %v68
    %v70 = vsel %vm69, %v62, 0.0
    %v71 = vsel %vm56, %v70, 0.0
    %72 = vadd.xlane.f32.xlu0 %v71
    %v73 = vpop.xlane.xlu0 %72
    %v74 = vrcp.pop %v65
    %v75 = vmul.f32 %v73, %v74
    %v76 = vsub.f32 1.0, %v75
    %v77 = vmul.f32 %v76, %v76
    %v78 = vmul.f32 %v77, -0.25
    %v79 = vadd.f32 %v75, 1e-09
    %v80 = vlog2.pop %v79
    %v81 = vmul.f32 %v80, 0.6931472
    %v82 = vmul.f32 %v78, %v81
    %s83 = sadd.s32 0, 0
    %s84 = smul.u32 %s83, 8
    %v85 = vlaneseq
    %v86 = vshrl.u32 %v85, 7
    %v87 = vstv %s84
    %v88 = vadd.s32 %v87, %v86
    %v89 = vld [vmem:[#allocation2] sm:$0xff]
    %vm90 = vcmp.lt.s32.totalorder %v88, 8
    %v91 = vsel %vm90, %v82, 0.0
    %v92 = vadd.f32 %v89, %v91
    %vm93 = vcmask 7168
    %94 = vst.msk [vmem:[#allocation2] sm:$0xff] %vm93, %v92
    // Predicated region
    $region14: #{tpu_custom_call.1} parent=1 // pred_check
      %p95 = pneg %p46
    $region15: #{tpu_custom_call.1} parent=1 // pred_check_branch
      %97 = sbr.rel (%p95) target = $region17
    $region16: #{tpu_custom_call.1} parent=1 // pred_region
      %v98 = vld [vmem:[#allocation2] sm:$0xff]
      %v99 = vsel %vm93, %v98, 0.0
      %100 = vadd.xlane.f32.xlu0 %v99
      %v101 = vpop.xlane.xlu0 %100
      %v102 = vrot.slane %v101, 4
      %v103 = vadd.f32 %v101, %v102
      %v104 = vrot.slane %v103, 2
      %v105 = vadd.f32 %v103, %v104
      %v106 = vrot.slane %v105, 1
      %v107 = vadd.f32 %v105, %v106
      %s108 = vtos %v107
      %v109 = vstv %s108
      %110 = vst [vmem:[#allocation3] sm:$0xff] %v109
    $region17: #{tpu_custom_call.1} parent=1 // pred_fallthru
      _
    // Predicated region
    $region18: #{tpu_custom_call.1} parent=1 // pred_check
      _
    $region19: #{tpu_custom_call.1} parent=1 // pred_check_branch
      %112 = sbr.rel (0) target = $region21
    $region20: #{tpu_custom_call.1} parent=1 // pred_region
      %s114 = ssub.s32 128, 128
      %115 = vsyncadd [#allocation4], %s114
      %s117 = sshll.u32 [#allocation3], 4
      %s118 = int_to_ptr.vmem [resolvable:$true] %s117
      %120 = dma.vmem_to_hbm [thread:$0]  %s118, 128, %s2, [#allocation4]
    $region21: #{tpu_custom_call.1} parent=1 // pred_fallthru
      _
    // Predicated region
    $region22: #{tpu_custom_call.1} parent=1 // pred_check
      _
    $region23: #{tpu_custom_call.1} parent=1 // pred_check_branch
      %122 = sbr.rel (0) target = $region25
    $region24: #{tpu_custom_call.1} parent=1 // pred_region
      %123 = dma.done [#allocation4], 128
    $region25: #{tpu_custom_call.1} parent=1 // pred_fallthru
      _
    %124 = vsyncpa [#allocation4], 1

</llo_original>
